<compile_context>
chip_gen: v5e
topology: v5e:2x2
jax: 0.10.0
libtpu: 0.0.40
codegen_flags: <defaults>
</compile_context>

<pallas_src>
import jax
import jax.numpy as jnp
from jax.experimental import pallas as pl
from jax.experimental.pallas import tpu as pltpu


HIDDEN = 64  # per-network hidden width (fused width = 2 * HIDDEN = 128)


def _round_up(x, m):
    return ((x + m - 1) // m) * m


def ppo_evaluate_kernel(
    state_ref, action_ref,
    w1_ref, b1_ref, w2_ref, b2_ref, w3_ref, b3_ref,
    out_ref,
):
    # state tile: [TB, D] bf16 ; fused weights in bf16 ; biases / math in f32.
    x = state_ref[...]

    # fused layer 1: one [TB, D] @ [D, 128] matmul feeds BOTH actor and critic.
    h1 = jnp.tanh(
        jnp.dot(x, w1_ref[...], preferred_element_type=jnp.float32) + b1_ref[...]
    )                                                                  # [TB, 128] f32

    # fused layer 2: block-diagonal [128, 128] keeps actor/critic paths independent.
    h2 = jnp.tanh(
        jnp.dot(h1.astype(jnp.bfloat16), w2_ref[...],
                preferred_element_type=jnp.float32) + b2_ref[...]
    )                                                                  # [TB, 128] f32

    # fused heads: block-diagonal [128, A+1] -> [ actor logits | critic value ].
    head = (jnp.dot(h2.astype(jnp.bfloat16), w3_ref[...],
                    preferred_element_type=jnp.float32) + b3_ref[...])  # [TB, A+1] f32

    n_act = head.shape[-1] - 1
    logits = head[:, :n_act]                                            # [TB, A]
    value = head[:, n_act:]                                             # [TB, 1]

    # numerically stable log-softmax (no padded logit columns -> no masking needed).
    m = jnp.max(logits, axis=-1, keepdims=True)
    z = logits - m
    lse = jnp.log(jnp.sum(jnp.exp(z), axis=-1, keepdims=True))
    log_probs = z - lse                                                 # [TB, A]
    probs = jnp.exp(log_probs)

    # gather log_prob at the taken action via one-hot select.
    act = action_ref[...]                                               # [TB, 1] int32
    col = jax.lax.broadcasted_iota(jnp.int32, log_probs.shape, 1)
    onehot = (col == act).astype(jnp.float32)
    logp = jnp.sum(log_probs * onehot, axis=-1, keepdims=True)          # [TB, 1]

    # Categorical entropy.
    ent = -jnp.sum(probs * log_probs, axis=-1, keepdims=True)           # [TB, 1]

    # single lane-packed output slab: col0=logp, col1=value, col2=entropy, rest 0.
    lane = jax.lax.broadcasted_iota(jnp.int32, out_ref.shape, 1)
    out_ref[...] = jnp.where(
        lane == 0, logp,
        jnp.where(lane == 1, value,
                  jnp.where(lane == 2, ent, 0.0)))


def pack_params(params, mm_dtype=jnp.bfloat16):
    """Pack per-layer actor/critic params into fused MXU-friendly tensors (once)."""
    (aw1, ab1, aw2, ab2, aw3, ab3, cw1, cb1, cw2, cb2, cw3, cb3) = params
    H = HIDDEN
    A = aw3.shape[1]

    w1 = jnp.concatenate([aw1, cw1], axis=1).astype(mm_dtype)           # [D, 2H]
    b1 = jnp.concatenate([ab1, cb1], axis=1).astype(jnp.float32)        # [1, 2H]

    w2 = jnp.zeros((2 * H, 2 * H), jnp.float32)
    w2 = w2.at[:H, :H].set(aw2).at[H:, H:].set(cw2).astype(mm_dtype)    # [2H, 2H]
    b2 = jnp.concatenate([ab2, cb2], axis=1).astype(jnp.float32)        # [1, 2H]

    w3 = jnp.zeros((2 * H, A + 1), jnp.float32)
    w3 = w3.at[:H, :A].set(aw3).at[H:, A:].set(cw3).astype(mm_dtype)    # [2H, A+1]
    b3 = jnp.concatenate([ab3, cb3], axis=1).astype(jnp.float32)        # [1, A+1]

    return (w1, b1, w2, b2, w3, b3)


def ppo_evaluate(state, action, packed, *, tile_b=512):
    """Pallas equivalent of TrainModel_PPO.evaluate(state, action).

    Returns (action_logprobs [B], state_values [B,1], dist_entropy [B]).
    """
    B, D = state.shape
    w1, b1, w2, b2, w3, b3 = packed
    A = w3.shape[1] - 1

    # batch tiling: multiple of 8 sublanes; pad explicitly so every block is full.
    tile_b = min(tile_b, _round_up(max(B, 8), 8))
    Bp = _round_up(B, tile_b)
    if Bp != B:
        state = jnp.pad(state, ((0, Bp - B), (0, 0)))
        action = jnp.pad(action, (0, Bp - B))

    state_mm = state.astype(jnp.bfloat16)          # halves HBM->VMEM state traffic
    action2d = action.reshape(Bp, 1).astype(jnp.int32)

    grid = (Bp // tile_b,)

    def full_spec(shape):
        # whole-array block, constant index map (loaded once, reused every step)
        return pl.BlockSpec(shape, lambda i: (0, 0))

    flops = 2 * Bp * (D * 128 + 128 * 128 + 128 * (A + 1))
    transcendentals = Bp * (2 * 128 + 2 * A)       # tanh(2x128) + exp(A) + log-ish
    bytes_accessed = (
        state_mm.size * 2 + action2d.size * 4 + Bp * 8 * 4
        + sum(int(t.size) * t.dtype.itemsize for t in packed)
    )

    out = pl.pallas_call(
        ppo_evaluate_kernel,
        out_shape=jax.ShapeDtypeStruct((Bp, 8), jnp.float32),
        grid=grid,
        in_specs=[
            pl.BlockSpec((tile_b, D), lambda i: (i, 0)),   # state tile (pipelined)
            pl.BlockSpec((tile_b, 1), lambda i: (i, 0)),   # actions tile
            full_spec(w1.shape), full_spec(b1.shape),
            full_spec(w2.shape), full_spec(b2.shape),
            full_spec(w3.shape), full_spec(b3.shape),
        ],
        out_specs=pl.BlockSpec((tile_b, 8), lambda i: (i, 0)),
        compiler_params=pltpu.CompilerParams(
            dimension_semantics=("parallel",),             # megacore sharding on v7x
        ),
        cost_estimate=pl.CostEstimate(
            flops=flops,
            transcendentals=transcendentals,
            bytes_accessed=bytes_accessed,
        ),
    )(state_mm, action2d, w1, b1, w2, b2, w3, b3)

    logp = out[:B, 0]
    val = out[:B, 1:2]
    ent = out[:B, 2]
    return logp, val, ent


def init_params(key, input_dim, output_dim, hidden=HIDDEN):
    """PyTorch-Linear-style init: U(-1/sqrt(fan_in), 1/sqrt(fan_in)).

    Weights stored as [in_features, out_features]; biases as [1, out_features].
    """
    def linear(k, fan_in, fan_out):
        kw, kb = jax.random.split(k)
        bound = 1.0 / jnp.sqrt(fan_in)
        w = jax.random.uniform(kw, (fan_in, fan_out), jnp.float32, -bound, bound)
        b = jax.random.uniform(kb, (1, fan_out), jnp.float32, -bound, bound)
        return w, b

    keys = jax.random.split(key, 6)
    aw1, ab1 = linear(keys[0], input_dim, hidden)      # actor
    aw2, ab2 = linear(keys[1], hidden, hidden)
    aw3, ab3 = linear(keys[2], hidden, output_dim)
    cw1, cb1 = linear(keys[3], input_dim, hidden)      # critic
    cw2, cb2 = linear(keys[4], hidden, hidden)
    cw3, cb3 = linear(keys[5], hidden, 1)
    return (aw1, ab1, aw2, ab2, aw3, ab3, cw1, cb1, cw2, cb2, cw3, cb3)


def reference_evaluate(state, action, params):
    """Plain-JAX f32 reference of the same computation (sanity check)."""
    (aw1, ab1, aw2, ab2, aw3, ab3, cw1, cb1, cw2, cb2, cw3, cb3) = params
    h = jnp.tanh(state @ aw1 + ab1)
    h = jnp.tanh(h @ aw2 + ab2)
    logits = h @ aw3 + ab3
    logp_all = jax.nn.log_softmax(logits, axis=-1)
    probs = jnp.exp(logp_all)
    logp = jnp.take_along_axis(logp_all, action.reshape(-1, 1), axis=-1)[:, 0]
    ent = -jnp.sum(probs * logp_all, axis=-1)
    hc = jnp.tanh(state @ cw1 + cb1)
    hc = jnp.tanh(hc @ cw2 + cb2)
    val = hc @ cw3 + cb3
    return logp, val, ent


if __name__ == "__main__":
    # Small shapes consistent with the module: state [B, input_dim], action [B].
    # B=20 with tile_b=8 exercises the multi-step grid and the pad/slice path.
    B, INPUT_DIM, OUTPUT_DIM = 20, 32, 8

    key = jax.random.PRNGKey(0)
    k_state, k_action, k_params = jax.random.split(key, 3)

    state = jax.random.normal(k_state, (B, INPUT_DIM), dtype=jnp.float32)
    action = jax.random.randint(k_action, (B,), 0, OUTPUT_DIM, dtype=jnp.int32)
    params = init_params(k_params, INPUT_DIM, OUTPUT_DIM)
    packed = pack_params(params)

    logp, val, ent = ppo_evaluate(state, action, packed, tile_b=8)
    jax.block_until_ready((logp, val, ent))

    # sanity-check against the plain-JAX f32 reference (bf16 matmuls -> loose tol).
    ref_logp, ref_val, ref_ent = reference_evaluate(state, action, params)
    assert jnp.allclose(logp, ref_logp, atol=2e-2, rtol=2e-2), "logprob mismatch"
    assert jnp.allclose(val, ref_val, atol=2e-2, rtol=2e-2), "value mismatch"
    assert jnp.allclose(ent, ref_ent, atol=2e-2, rtol=2e-2), "entropy mismatch"

    print("KERNEL_OK")
</pallas_src>

<mosaic_0001>
module attributes {stable_mosaic.version = 11 : i64} {
  func.func @ppo_evaluate_kernel(%arg0: i32, %arg1: memref<8x32xbf16, #tpu.memory_space<vmem>>, %arg2: memref<8x1xi32, #tpu.memory_space<vmem>>, %arg3: memref<32x128xbf16, #tpu.memory_space<vmem>>, %arg4: memref<1x128xf32, #tpu.memory_space<vmem>>, %arg5: memref<128x128xbf16, #tpu.memory_space<vmem>>, %arg6: memref<1x128xf32, #tpu.memory_space<vmem>>, %arg7: memref<128x9xbf16, #tpu.memory_space<vmem>>, %arg8: memref<1x9xf32, #tpu.memory_space<vmem>>, %arg9: memref<8x8xf32, #tpu.memory_space<vmem>>) attributes {dimension_semantics = [#tpu.dimension_semantics<parallel>], iteration_bounds = array<i64: 3>, scalar_prefetch = 0 : i64, scratch_operands = 0 : i64, tpu.core_type = #tpu.core_type<tc>, window_params = [{transform_indices = @transform_0, window_bounds = array<i64: 8, 32>}, {transform_indices = @transform_1, window_bounds = array<i64: 8, 1>}, {pipeline_mode = #tpu.pipeline_mode<synchronous>, transform_indices = @transform_2, window_bounds = array<i64: 32, 128>}, {pipeline_mode = #tpu.pipeline_mode<synchronous>, transform_indices = @transform_3, window_bounds = array<i64: 1, 128>}, {pipeline_mode = #tpu.pipeline_mode<synchronous>, transform_indices = @transform_4, window_bounds = array<i64: 128, 128>}, {pipeline_mode = #tpu.pipeline_mode<synchronous>, transform_indices = @transform_5, window_bounds = array<i64: 1, 128>}, {pipeline_mode = #tpu.pipeline_mode<synchronous>, transform_indices = @transform_6, window_bounds = array<i64: 128, 9>}, {pipeline_mode = #tpu.pipeline_mode<synchronous>, transform_indices = @transform_7, window_bounds = array<i64: 1, 9>}, {transform_indices = @transform_8, window_bounds = array<i64: 8, 8>}]} {
    %c0 = arith.constant 0 : index
    %c0_0 = arith.constant 0 : index
    %0 = vector.load %arg1[%c0, %c0_0] : memref<8x32xbf16, #tpu.memory_space<vmem>>, vector<8x32xbf16>
    %c0_1 = arith.constant 0 : index
    %c0_2 = arith.constant 0 : index
    %1 = vector.load %arg3[%c0_1, %c0_2] : memref<32x128xbf16, #tpu.memory_space<vmem>>, vector<32x128xbf16>
    %cst = arith.constant dense<0.000000e+00> : vector<8x128xf32>
    %2 = tpu.matmul %0, %1, %cst {dimension_numbers = #tpu.dot_dimension_numbers<[1], [0], [0], [1], [0, 0, 1, 1], [], []>} : vector<8x32xbf16>, vector<32x128xbf16>, vector<8x128xf32> -> vector<8x128xf32>
    %c0_3 = arith.constant 0 : index
    %c0_4 = arith.constant 0 : index
    %3 = vector.load %arg4[%c0_3, %c0_4] : memref<1x128xf32, #tpu.memory_space<vmem>>, vector<1x128xf32>
    %4 = vector.broadcast %3 : vector<1x128xf32> to vector<8x128xf32>
    %5 = arith.addf %2, %4 : vector<8x128xf32>
    %6 = math.tanh %5 : vector<8x128xf32>
    %7 = arith.truncf %6 : vector<8x128xf32> to vector<8x128xbf16>
    %c0_5 = arith.constant 0 : index
    %c0_6 = arith.constant 0 : index
    %8 = vector.load %arg5[%c0_5, %c0_6] : memref<128x128xbf16, #tpu.memory_space<vmem>>, vector<128x128xbf16>
    %cst_7 = arith.constant dense<0.000000e+00> : vector<8x128xf32>
    %9 = tpu.matmul %7, %8, %cst_7 {dimension_numbers = #tpu.dot_dimension_numbers<[1], [0], [0], [1], [0, 0, 1, 1], [], []>} : vector<8x128xbf16>, vector<128x128xbf16>, vector<8x128xf32> -> vector<8x128xf32>
    %c0_8 = arith.constant 0 : index
    %c0_9 = arith.constant 0 : index
    %10 = vector.load %arg6[%c0_8, %c0_9] : memref<1x128xf32, #tpu.memory_space<vmem>>, vector<1x128xf32>
    %11 = vector.broadcast %10 : vector<1x128xf32> to vector<8x128xf32>
    %12 = arith.addf %9, %11 : vector<8x128xf32>
    %13 = math.tanh %12 : vector<8x128xf32>
    %14 = arith.truncf %13 : vector<8x128xf32> to vector<8x128xbf16>
    %c0_10 = arith.constant 0 : index
    %c0_11 = arith.constant 0 : index
    %15 = vector.load %arg7[%c0_10, %c0_11] : memref<128x9xbf16, #tpu.memory_space<vmem>>, vector<128x9xbf16>
    %cst_12 = arith.constant dense<0.000000e+00> : vector<8x9xf32>
    %16 = tpu.matmul %14, %15, %cst_12 {dimension_numbers = #tpu.dot_dimension_numbers<[1], [0], [0], [1], [0, 0, 1, 1], [], []>} : vector<8x128xbf16>, vector<128x9xbf16>, vector<8x9xf32> -> vector<8x9xf32>
    %c0_13 = arith.constant 0 : index
    %c0_14 = arith.constant 0 : index
    %17 = vector.load %arg8[%c0_13, %c0_14] : memref<1x9xf32, #tpu.memory_space<vmem>>, vector<1x9xf32>
    %18 = vector.broadcast %17 : vector<1x9xf32> to vector<8x9xf32>
    %19 = arith.addf %16, %18 : vector<8x9xf32>
    %20 = vector.extract_strided_slice %19 {offsets = [0, 0], sizes = [8, 8], strides = [1, 1]} : vector<8x9xf32> to vector<8x8xf32>
    %21 = vector.extract_strided_slice %19 {offsets = [0, 8], sizes = [8, 1], strides = [1, 1]} : vector<8x9xf32> to vector<8x1xf32>
    %cst_15 = arith.constant dense<0xFF800000> : vector<8xf32>
    %22 = vector.multi_reduction <maximumf>, %20, %cst_15 [1] : vector<8x8xf32> to vector<8xf32>
    %23 = vector.shape_cast %22 : vector<8xf32> to vector<8x1xf32>
    %24 = vector.broadcast %23 : vector<8x1xf32> to vector<8x8xf32>
    %25 = arith.subf %20, %24 : vector<8x8xf32>
    %26 = math.exp %25 : vector<8x8xf32>
    %cst_16 = arith.constant dense<0.000000e+00> : vector<8xf32>
    %27 = vector.multi_reduction <add>, %26, %cst_16 [1] : vector<8x8xf32> to vector<8xf32>
    %28 = vector.shape_cast %27 : vector<8xf32> to vector<8x1xf32>
    %29 = math.log %28 : vector<8x1xf32>
    %30 = vector.broadcast %29 : vector<8x1xf32> to vector<8x8xf32>
    %31 = arith.subf %25, %30 : vector<8x8xf32>
    %32 = math.exp %31 : vector<8x8xf32>
    %c0_17 = arith.constant 0 : index
    %c0_18 = arith.constant 0 : index
    %33 = vector.load %arg2[%c0_17, %c0_18] : memref<8x1xi32, #tpu.memory_space<vmem>>, vector<8x1xi32>
    %34 = tpu.iota {dimensions = array<i32: 1>} : vector<8x8xi32>
    %35 = vector.broadcast %33 : vector<8x1xi32> to vector<8x8xi32>
    %36 = arith.cmpi eq, %34, %35 : vector<8x8xi32>
    %37 = arith.extui %36 : vector<8x8xi1> to vector<8x8xi32>
    %38 = arith.sitofp %37 : vector<8x8xi32> to vector<8x8xf32>
    %39 = arith.mulf %31, %38 : vector<8x8xf32>
    %cst_19 = arith.constant dense<0.000000e+00> : vector<8xf32>
    %40 = vector.multi_reduction <add>, %39, %cst_19 [1] : vector<8x8xf32> to vector<8xf32>
    %41 = vector.shape_cast %40 : vector<8xf32> to vector<8x1xf32>
    %42 = arith.mulf %32, %31 : vector<8x8xf32>
    %cst_20 = arith.constant dense<0.000000e+00> : vector<8xf32>
    %43 = vector.multi_reduction <add>, %42, %cst_20 [1] : vector<8x8xf32> to vector<8xf32>
    %44 = vector.shape_cast %43 : vector<8xf32> to vector<8x1xf32>
    %cst_21 = arith.constant 0.000000e+00 : f32
    %45 = vector.broadcast %cst_21 : f32 to vector<8x1xf32>
    %46 = arith.subf %45, %44 : vector<8x1xf32>
    %47 = tpu.iota {dimensions = array<i32: 1>} : vector<8x8xi32>
    %c0_i32 = arith.constant 0 : i32
    %48 = vector.broadcast %c0_i32 : i32 to vector<8x8xi32>
    %49 = arith.cmpi eq, %47, %48 : vector<8x8xi32>
    %c1_i32 = arith.constant 1 : i32
    %50 = vector.broadcast %c1_i32 : i32 to vector<8x8xi32>
    %51 = arith.cmpi eq, %47, %50 : vector<8x8xi32>
    %c2_i32 = arith.constant 2 : i32
    %52 = vector.broadcast %c2_i32 : i32 to vector<8x8xi32>
    %53 = arith.cmpi eq, %47, %52 : vector<8x8xi32>
    %cst_22 = arith.constant 0.000000e+00 : f32
    %54 = vector.shape_cast %46 : vector<8x1xf32> to vector<8x1xf32>
    %55 = vector.broadcast %54 : vector<8x1xf32> to vector<8x8xf32>
    %56 = vector.broadcast %cst_22 : f32 to vector<8x8xf32>
    %57 = arith.select %53, %55, %56 : vector<8x8xi1>, vector<8x8xf32>
    %58 = vector.shape_cast %21 : vector<8x1xf32> to vector<8x1xf32>
    %59 = vector.broadcast %58 : vector<8x1xf32> to vector<8x8xf32>
    %60 = arith.select %51, %59, %57 : vector<8x8xi1>, vector<8x8xf32>
    %61 = vector.shape_cast %41 : vector<8x1xf32> to vector<8x1xf32>
    %62 = vector.broadcast %61 : vector<8x1xf32> to vector<8x8xf32>
    %63 = arith.select %49, %62, %60 : vector<8x8xi1>, vector<8x8xf32>
    %c0_23 = arith.constant 0 : index
    %c0_24 = arith.constant 0 : index
    %64 = vector.load %arg9[%c0_23, %c0_24] : memref<8x8xf32, #tpu.memory_space<vmem>>, vector<8x8xf32>
    tpu.vector_store %arg9[%c0_23, %c0_24], %63 {strides = array<i32>} : memref<8x8xf32, #tpu.memory_space<vmem>>, vector<8x8xf32>,
    return
  }
  func.func @transform_0(%arg0: i32) -> (i32, i32) {
    %c0_i32 = arith.constant 0 : i32
    %c0_i32_0 = arith.constant 0 : i32
    return %arg0, %c0_i32 : i32, i32
  }
  func.func @transform_1(%arg0: i32) -> (i32, i32) {
    %c0_i32 = arith.constant 0 : i32
    %c0_i32_0 = arith.constant 0 : i32
    return %arg0, %c0_i32 : i32, i32
  }
  func.func @transform_2(%arg0: i32) -> (i32, i32) {
    %c0_i32 = arith.constant 0 : i32
    %c0_i32_0 = arith.constant 0 : i32
    %c0_i32_1 = arith.constant 0 : i32
    return %c0_i32, %c0_i32_0 : i32, i32
  }
  func.func @transform_3(%arg0: i32) -> (i32, i32) {
    %c0_i32 = arith.constant 0 : i32
    %c0_i32_0 = arith.constant 0 : i32
    %c0_i32_1 = arith.constant 0 : i32
    return %c0_i32, %c0_i32_0 : i32, i32
  }
  func.func @transform_4(%arg0: i32) -> (i32, i32) {
    %c0_i32 = arith.constant 0 : i32
    %c0_i32_0 = arith.constant 0 : i32
    %c0_i32_1 = arith.constant 0 : i32
    return %c0_i32, %c0_i32_0 : i32, i32
  }
  func.func @transform_5(%arg0: i32) -> (i32, i32) {
    %c0_i32 = arith.constant 0 : i32
    %c0_i32_0 = arith.constant 0 : i32
    %c0_i32_1 = arith.constant 0 : i32
    return %c0_i32, %c0_i32_0 : i32, i32
  }
  func.func @transform_6(%arg0: i32) -> (i32, i32) {
    %c0_i32 = arith.constant 0 : i32
    %c0_i32_0 = arith.constant 0 : i32
    %c0_i32_1 = arith.constant 0 : i32
    return %c0_i32, %c0_i32_0 : i32, i32
  }
  func.func @transform_7(%arg0: i32) -> (i32, i32) {
    %c0_i32 = arith.constant 0 : i32
    %c0_i32_0 = arith.constant 0 : i32
    %c0_i32_1 = arith.constant 0 : i32
    return %c0_i32, %c0_i32_0 : i32, i32
  }
  func.func @transform_8(%arg0: i32) -> (i32, i32) {
    %c0_i32 = arith.constant 0 : i32
    %c0_i32_0 = arith.constant 0 : i32
    return %arg0, %c0_i32 : i32, i32
  }
}

</mosaic_0001>

<llo_original>
// kernel: tpu_custom_call.1
$region0: #{tpu_custom_call.1}
  #allocation0 [shape = 'u32[]', space=smem, size = 0x4, offset = 0x4, fixed_abs, tag = 'smem constant byte address 0x4 - core index']
  #allocation1 [shape = 'u32[72,128]{1,0:T(1,128)}', space=vmem, size = 0x9000, scoped, tag = 'internal scratch']
  %s0 = inlined_call_operand.vmem [shape: bf16[24,32], index: 0, kind: input, shape index: {}]
  %s1 = inlined_call_operand.vmem [shape: s32[24,1], index: 1, kind: input, shape index: {}]
  %s2 = inlined_call_operand.vmem [shape: bf16[32,128], index: 2, kind: input, shape index: {}]
  %s3 = inlined_call_operand.vmem [shape: f32[1,128], index: 3, kind: input, shape index: {}]
  %s4 = inlined_call_operand.vmem [shape: bf16[128,128], index: 4, kind: input, shape index: {}]
  %s5 = inlined_call_operand.hbm [shape: f32[1,128], index: 5, kind: input, shape index: {}]
  %s6 = inlined_call_operand.vmem [shape: bf16[128,9], index: 6, kind: input, shape index: {}]
  %s7 = inlined_call_operand.vmem [shape: f32[1,9], index: 7, kind: input, shape index: {}]
  %s8 = inlined_call_operand.vmem [shape: f32[24,8], index: 8, kind: output, shape index: {}]
  %s9 = sld [smem:[#allocation0]]
  $region69: #{tpu_custom_call.1} parent=0
    _
  %s11 = ssub.s32 1, %s9
  %s12 = scalar_select 0, %s11, %s9
  $region1: #{tpu_custom_call.1} parent=0
    #allocation2 [shape = 'u8[512]{0}', space=vmem, size = 0x400, scoped, tag = 'input window, operand 5, single buffered']
    #allocation3 [shape = 's32[2]{0}', space=sflag, size = 0x8, scoped, tag = 'scoped memory for tpu_custom_call.1']
    %13 = vsyncpa [#allocation3], 0
    loop: start=0, step=1, limit=5
    $region2: #{tpu_custom_call.1} parent=1 // loop_pre_header
      _
    $region3: #{tpu_custom_call.1} parent=1 // loop_header
      %s15 = sphi 0, %s19
      %p16 = scmp.ge.s32.totalorder %s15, 5
      %s25 = sphi 0, %s27
      %s28 = sphi 0, %s25
      %s29 = sphi 0, %s28
      %s45 = sphi 0, %s29
      %s51 = sphi 0, %s53
      %s54 = sphi 0, %s51
      %s55 = sphi 0, %s54
      %s71 = sphi 0, %s55
      %s75 = sphi 0, %s75
      %s77 = sphi 0, %s75
      %s78 = sphi 0, %s77
      %s92 = sphi 0, %s78
      %s96 = sphi 0, %s96
      %s98 = sphi 0, %s96
      %s99 = sphi 0, %s98
      %s113 = sphi 0, %s99
      %s117 = sphi 0, %s117
      %s119 = sphi 0, %s117
      %s120 = sphi 0, %s119
      %s134 = sphi 0, %s120
      %s138 = sphi 0, %s138
      %s140 = sphi 0, %s138
      %s141 = sphi 0, %s140
      %s155 = sphi 0, %s141
      %s159 = sphi 0, %s159
      %s161 = sphi 0, %s159
      %s162 = sphi 0, %s161
      %s176 = sphi 0, %s162
      %s180 = sphi 0, %s180
      %s182 = sphi 0, %s180
      %s183 = sphi 0, %s182
      %s197 = sphi 0, %s183
      %s203 = sphi 0, %s205
      %s206 = sphi 0, %s203
      %s207 = sphi 0, %s206
      %s223 = sphi 0, %s207
    $region4: #{tpu_custom_call.1} parent=1 // loop_header_branch
      %18 = sbr.rel (%p16) target = $region8
    $region5: #{tpu_custom_call.1} parent=1 // loop_body
      %s20 = ssub.s32 %s15, 1
      %s21 = ssub.s32 %s15, 2
      %s22 = sadd.s32 %s15, 1
      %s23 = ssub.s32 %s15, %s22
      %p24 = scmp.eq.s32.totalorder %s23, 0
      %s26 = sadd.s32 %s25, 1
      %s27 = scalar_select %p24, %s25, %s26
      %p30 = pneg %p24
      %p31 = scmp.eq.s32.totalorder %s15, 2
      %p32 = por %p30, %p31
      %p33 = scmp.ne.s32.totalorder %s25, %s28
      %p34 = scmp.eq.s32.totalorder %s15, 0
      %p35 = por %p33, %p34
      %p36 = scmp.ne.s32.totalorder %s25, %s28
      %p37 = scmp.eq.s32.totalorder %s20, 2
      %p38 = por %p36, %p37
      %p39 = scmp.ne.s32.totalorder %s28, %s29
      %p40 = scmp.eq.s32.totalorder %s20, 0
      %p41 = por %p39, %p40
      %p42 = scmp.ne.s32.totalorder %s28, %s29
      %p43 = scmp.eq.s32.totalorder %s21, 2
      %p44 = por %p42, %p43
      %p46 = scmp.ne.s32.totalorder %s29, %s45
      %p47 = scmp.eq.s32.totalorder %s21, 0
      %p48 = por %p46, %p47
      %s49 = ssub.s32 %s15, %s22
      %p50 = scmp.eq.s32.totalorder %s49, 0
      %s52 = sadd.s32 %s51, 1
      %s53 = scalar_select %p50, %s51, %s52
      %p56 = pneg %p50
      %p57 = scmp.eq.s32.totalorder %s15, 2
      %p58 = por %p56, %p57
      %p59 = scmp.ne.s32.totalorder %s51, %s54
      %p60 = scmp.eq.s32.totalorder %s15, 0
      %p61 = por %p59, %p60
      %p62 = scmp.ne.s32.totalorder %s51, %s54
      %p63 = scmp.eq.s32.totalorder %s20, 2
      %p64 = por %p62, %p63
      %p65 = scmp.ne.s32.totalorder %s54, %s55
      %p66 = scmp.eq.s32.totalorder %s20, 0
      %p67 = por %p65, %p66
      %p68 = scmp.ne.s32.totalorder %s54, %s55
      %p69 = scmp.eq.s32.totalorder %s21, 2
      %p70 = por %p68, %p69
      %p72 = scmp.ne.s32.totalorder %s55, %s71
      %p73 = scmp.eq.s32.totalorder %s21, 0
      %p74 = por %p72, %p73
      %s76 = sadd.s32 %s75, 1
      %p79 = scmp.eq.s32.totalorder %s15, 2
      %p80 = scmp.ne.s32.totalorder %s75, %s77
      %p81 = scmp.eq.s32.totalorder %s15, 0
      %p82 = por %p80, %p81
      %p83 = scmp.ne.s32.totalorder %s75, %s77
      %p84 = scmp.eq.s32.totalorder %s20, 2
      %p85 = por %p83, %p84
      %p86 = scmp.ne.s32.totalorder %s77, %s78
      %p87 = scmp.eq.s32.totalorder %s20, 0
      %p88 = por %p86, %p87
      %p89 = scmp.ne.s32.totalorder %s77, %s78
      %p90 = scmp.eq.s32.totalorder %s21, 2
      %p91 = por %p89, %p90
      %p93 = scmp.ne.s32.totalorder %s78, %s92
      %p94 = scmp.eq.s32.totalorder %s21, 0
      %p95 = por %p93, %p94
      %s97 = sadd.s32 %s96, 1
      %p100 = scmp.eq.s32.totalorder %s15, 2
      %p101 = scmp.ne.s32.totalorder %s96, %s98
      %p102 = scmp.eq.s32.totalorder %s15, 0
      %p103 = por %p101, %p102
      %p104 = scmp.ne.s32.totalorder %s96, %s98
      %p105 = scmp.eq.s32.totalorder %s20, 2
      %p106 = por %p104, %p105
      %p107 = scmp.ne.s32.totalorder %s98, %s99
      %p108 = scmp.eq.s32.totalorder %s20, 0
      %p109 = por %p107, %p108
      %p110 = scmp.ne.s32.totalorder %s98, %s99
      %p111 = scmp.eq.s32.totalorder %s21, 2
      %p112 = por %p110, %p111
      %p114 = scmp.ne.s32.totalorder %s99, %s113
      %p115 = scmp.eq.s32.totalorder %s21, 0
      %p116 = por %p114, %p115
      %s118 = sadd.s32 %s117, 1
      %p121 = scmp.eq.s32.totalorder %s15, 2
      %p122 = scmp.ne.s32.totalorder %s117, %s119
      %p123 = scmp.eq.s32.totalorder %s15, 0
      %p124 = por %p122, %p123
      %p125 = scmp.ne.s32.totalorder %s117, %s119
      %p126 = scmp.eq.s32.totalorder %s20, 2
      %p127 = por %p125, %p126
      %p128 = scmp.ne.s32.totalorder %s119, %s120
      %p129 = scmp.eq.s32.totalorder %s20, 0
      %p130 = por %p128, %p129
      %p131 = scmp.ne.s32.totalorder %s119, %s120
      %p132 = scmp.eq.s32.totalorder %s21, 2
      %p133 = por %p131, %p132
      %p135 = scmp.ne.s32.totalorder %s120, %s134
      %p136 = scmp.eq.s32.totalorder %s21, 0
      %p137 = por %p135, %p136
      %s139 = sadd.s32 %s138, 1
      %p142 = scmp.eq.s32.totalorder %s15, 2
      %p143 = scmp.ne.s32.totalorder %s138, %s140
      %p144 = scmp.eq.s32.totalorder %s15, 0
      %p145 = por %p143, %p144
      %p146 = scmp.ne.s32.totalorder %s138, %s140
      %p147 = scmp.eq.s32.totalorder %s20, 2
      %p148 = por %p146, %p147
      %p149 = scmp.ne.s32.totalorder %s140, %s141
      %p150 = scmp.eq.s32.totalorder %s20, 0
      %p151 = por %p149, %p150
      %p152 = scmp.ne.s32.totalorder %s140, %s141
      %p153 = scmp.eq.s32.totalorder %s21, 2
      %p154 = por %p152, %p153
      %p156 = scmp.ne.s32.totalorder %s141, %s155
      %p157 = scmp.eq.s32.totalorder %s21, 0
      %p158 = por %p156, %p157
      %s160 = sadd.s32 %s159, 1
      %p163 = scmp.eq.s32.totalorder %s15, 2
      %p164 = scmp.ne.s32.totalorder %s159, %s161
      %p165 = scmp.eq.s32.totalorder %s15, 0
      %p166 = por %p164, %p165
      %p167 = scmp.ne.s32.totalorder %s159, %s161
      %p168 = scmp.eq.s32.totalorder %s20, 2
      %p169 = por %p167, %p168
      %p170 = scmp.ne.s32.totalorder %s161, %s162
      %p171 = scmp.eq.s32.totalorder %s20, 0
      %p172 = por %p170, %p171
      %p173 = scmp.ne.s32.totalorder %s161, %s162
      %p174 = scmp.eq.s32.totalorder %s21, 2
      %p175 = por %p173, %p174
      %p177 = scmp.ne.s32.totalorder %s162, %s176
      %p178 = scmp.eq.s32.totalorder %s21, 0
      %p179 = por %p177, %p178
      %s181 = sadd.s32 %s180, 1
      %p184 = scmp.eq.s32.totalorder %s15, 2
      %p185 = scmp.ne.s32.totalorder %s180, %s182
      %p186 = scmp.eq.s32.totalorder %s15, 0
      %p187 = por %p185, %p186
      %p188 = scmp.ne.s32.totalorder %s180, %s182
      %p189 = scmp.eq.s32.totalorder %s20, 2
      %p190 = por %p188, %p189
      %p191 = scmp.ne.s32.totalorder %s182, %s183
      %p192 = scmp.eq.s32.totalorder %s20, 0
      %p193 = por %p191, %p192
      %p194 = scmp.ne.s32.totalorder %s182, %s183
      %p195 = scmp.eq.s32.totalorder %s21, 2
      %p196 = por %p194, %p195
      %p198 = scmp.ne.s32.totalorder %s183, %s197
      %p199 = scmp.eq.s32.totalorder %s21, 0
      %p200 = por %p198, %p199
      %s201 = ssub.s32 %s15, %s22
      %p202 = scmp.eq.s32.totalorder %s201, 0
      %s204 = sadd.s32 %s203, 1
      %s205 = scalar_select %p202, %s203, %s204
      %p208 = pneg %p202
      %p209 = scmp.eq.s32.totalorder %s15, 2
      %p210 = por %p208, %p209
      %p211 = scmp.ne.s32.totalorder %s203, %s206
      %p212 = scmp.eq.s32.totalorder %s15, 0
      %p213 = por %p211, %p212
      %p214 = scmp.ne.s32.totalorder %s203, %s206
      %p215 = scmp.eq.s32.totalorder %s20, 2
      %p216 = por %p214, %p215
      %p217 = scmp.ne.s32.totalorder %s206, %s207
      %p218 = scmp.eq.s32.totalorder %s20, 0
      %p219 = por %p217, %p218
      %p220 = scmp.ne.s32.totalorder %s206, %s207
      %p221 = scmp.eq.s32.totalorder %s21, 2
      %p222 = por %p220, %p221
      %p224 = scmp.ne.s32.totalorder %s207, %s223
      %p225 = scmp.eq.s32.totalorder %s21, 0
      %p226 = por %p224, %p225
      %p227 = scmp.le.s32.totalorder 1, %s15
      %p228 = scmp.lt.s32.totalorder %s15, 4
      %p229 = pnand %p227, %p228
      %p230 = pneg %p229
      // Predicated region
      $region9: #{tpu_custom_call.1} parent=5 // pred_check
        _
      $region10: #{tpu_custom_call.1} parent=5 // pred_check_branch
        %232 = sbr.rel (%p229) target = $region12
      $region11: #{tpu_custom_call.1} parent=5 // pred_region
        %s233 = ssub.s32 %s15, 1
        // Predicated region
        $region13: #{tpu_custom_call.1} parent=11 // pred_check
          %p234 = pneg %p88
        $region14: #{tpu_custom_call.1} parent=11 // pred_check_branch
          %236 = sbr.rel (%p234) target = $region16
        $region15: #{tpu_custom_call.1} parent=11 // pred_region
          _
        $region16: #{tpu_custom_call.1} parent=11 // pred_fallthru
          _
        // Predicated region
        $region17: #{tpu_custom_call.1} parent=11 // pred_check
          %p237 = pneg %p109
        $region18: #{tpu_custom_call.1} parent=11 // pred_check_branch
          %239 = sbr.rel (%p237) target = $region20
        $region19: #{tpu_custom_call.1} parent=11 // pred_region
          _
        $region20: #{tpu_custom_call.1} parent=11 // pred_fallthru
          _
        // Predicated region
        $region21: #{tpu_custom_call.1} parent=11 // pred_check
          %p240 = pneg %p130
        $region22: #{tpu_custom_call.1} parent=11 // pred_check_branch
          %242 = sbr.rel (%p240) target = $region24
        $region23: #{tpu_custom_call.1} parent=11 // pred_region
          _
        $region24: #{tpu_custom_call.1} parent=11 // pred_fallthru
          _
        // Predicated region
        $region25: #{tpu_custom_call.1} parent=11 // pred_check
          %p243 = pneg %p151
        $region26: #{tpu_custom_call.1} parent=11 // pred_check_branch
          %245 = sbr.rel (%p243) target = $region28
        $region27: #{tpu_custom_call.1} parent=11 // pred_region
          %247 = vsyncadd [#allocation3], 0
          %s249 = sshll.u32 %s5, 4
          %s250 = int_to_ptr.hbm [resolvable:$true] %s249
          %s251 = sshll.u32 [#allocation2], 4
          %s252 = int_to_ptr.vmem [resolvable:$true] %s251
          %254 = dma.hbm_to_vmem [thread:$0]  %s250, 16, %s252, [#allocation3]
        $region28: #{tpu_custom_call.1} parent=11 // pred_fallthru
          _
        // Predicated region
        $region29: #{tpu_custom_call.1} parent=11 // pred_check
          %p255 = pneg %p172
        $region30: #{tpu_custom_call.1} parent=11 // pred_check_branch
          %257 = sbr.rel (%p255) target = $region32
        $region31: #{tpu_custom_call.1} parent=11 // pred_region
          _
        $region32: #{tpu_custom_call.1} parent=11 // pred_fallthru
          _
        // Predicated region
        $region33: #{tpu_custom_call.1} parent=11 // pred_check
          %p258 = pneg %p193
        $region34: #{tpu_custom_call.1} parent=11 // pred_check_branch
          %260 = sbr.rel (%p258) target = $region36
        $region35: #{tpu_custom_call.1} parent=11 // pred_region
          _
        $region36: #{tpu_custom_call.1} parent=11 // pred_fallthru
          _
      $region12: #{tpu_custom_call.1} parent=5 // pred_fallthru
        _
      %p261 = scmp.lt.s32.totalorder %s15, 3
      // Predicated region
      $region37: #{tpu_custom_call.1} parent=5 // pred_check
        %p262 = pneg %p261
      $region38: #{tpu_custom_call.1} parent=5 // pred_check_branch
        %264 = sbr.rel (%p262) target = $region40
      $region39: #{tpu_custom_call.1} parent=5 // pred_region
        // Predicated region
        $region41: #{tpu_custom_call.1} parent=39 // pred_check
          %p265 = pneg %p35
        $region42: #{tpu_custom_call.1} parent=39 // pred_check_branch
          %267 = sbr.rel (%p265) target = $region44
        $region43: #{tpu_custom_call.1} parent=39 // pred_region
          %p268 = scmp.lt.s32.totalorder %s15, 2
          %s269 = scalar_select %p268, %s15, 2
          %s270 = smul.addr %s269, 4
          %s271 = scalar_lea.vmem %s0, %s270
        $region44: #{tpu_custom_call.1} parent=39 // pred_fallthru
          _
        // Predicated region
        $region45: #{tpu_custom_call.1} parent=39 // pred_check
          %p272 = pneg %p61
        $region46: #{tpu_custom_call.1} parent=39 // pred_check_branch
          %274 = sbr.rel (%p272) target = $region48
        $region47: #{tpu_custom_call.1} parent=39 // pred_region
          %p275 = scmp.lt.s32.totalorder %s15, 2
          %s276 = scalar_select %p275, %s15, 2
          %s277 = smul.addr %s276, 8
          %s278 = scalar_lea.vmem %s1, %s277
        $region48: #{tpu_custom_call.1} parent=39 // pred_fallthru
          _
      $region40: #{tpu_custom_call.1} parent=5 // pred_fallthru
        _
      %p279 = scmp.le.s32.totalorder 1, %s15
      %p280 = scmp.lt.s32.totalorder %s15, 4
      %p281 = pnand %p279, %p280
      %p282 = pneg %p281
      // Predicated region
      $region49: #{tpu_custom_call.1} parent=5 // pred_check
        _
      $region50: #{tpu_custom_call.1} parent=5 // pred_check_branch
        %284 = sbr.rel (%p281) target = $region52
      $region51: #{tpu_custom_call.1} parent=5 // pred_region
        %s285 = ssub.s32 %s15, 1
        // Predicated region
        $region53: #{tpu_custom_call.1} parent=51 // pred_check
          %p286 = pneg %p151
        $region54: #{tpu_custom_call.1} parent=51 // pred_check_branch
          %288 = sbr.rel (%p286) target = $region56
        $region55: #{tpu_custom_call.1} parent=51 // pred_region
          %290 = dma.done [#allocation3], 16
        $region56: #{tpu_custom_call.1} parent=51 // pred_fallthru
          _
        %p291 = scmp.lt.s32.totalorder %s20, 2
        %s292 = scalar_select %p291, %s20, 2
        %s293 = smul.addr %s292, 4
        %s294 = scalar_lea.vmem %s0, %s293
        %p295 = pneg %p41
        %p296 = pneg %p38
        %p297 = scmp.lt.s32.totalorder %s20, 2
        %s298 = scalar_select %p297, %s20, 2
        %s299 = smul.addr %s298, 8
        %s300 = scalar_lea.vmem %s1, %s299
        %p301 = pneg %p67
        %p302 = pneg %p64
        %p303 = pneg %p88
        %p304 = pneg %p85
        %p305 = pneg %p109
        %p306 = pneg %p106
        %p307 = pneg %p130
        %p308 = pneg %p127
        %p309 = pneg %p151
        %p310 = pneg %p148
        %p311 = pneg %p172
        %p312 = pneg %p169
        %p313 = pneg %p193
        %p314 = pneg %p190
        %p315 = pneg %p219
        %p316 = pneg %p216
        %p317 = scmp.lt.s32.totalorder %s20, 2
        %s318 = scalar_select %p317, %s20, 2
        %s319 = smul.addr %s318, 8
        %s320 = scalar_lea.vmem %s8, %s319
        %p321 = scmp.lt.s32.totalorder %s20, 2
        %s322 = scalar_select %p321, %s20, 2
        %s323 = smul.addr %s322, 4
        %s324 = scalar_lea.vmem %s0, %s323
        %p325 = scmp.lt.s32.totalorder %s20, 2
        %s326 = scalar_select %p325, %s20, 2
        %s327 = smul.addr %s326, 8
        %s328 = scalar_lea.vmem %s1, %s327
        %p329 = scmp.lt.s32.totalorder %s20, 2
        %s330 = scalar_select %p329, %s20, 2
        %s331 = smul.addr %s330, 8
        %s332 = scalar_lea.vmem %s8, %s331
        %v334 = vld [vmem:[%s324] sm:$0xf]
        %v335 = vld [vmem:[%s2] sm:$0xf]
        %v336 = vld [vmem:[%s2 + $0x4] sm:$0xf]
        %v337 = vld [vmem:[%s2 + $0x8] sm:$0xf]
        %v338 = vld [vmem:[%s2 + $0xc] sm:$0xf]
        %v339 = vld [vmem:[%s3] sm:$0x1]
        %v341 = vperm.slane %v339, 0
        %v347 = vunpack.c.l.b16 %v335
        %v348 = vunpack.c.l.b16 %v336
        %v349 = vunpack.c.l.b16 %v337
        %v350 = vunpack.c.l.b16 %v338
        %v351 = vpack.c.b16 %v348, %v347
        %v352 = vpack.c.b16 %v350, %v349
        %vm355 = vcmask 261120
        %v357 = vsel %vm355, %v334, 0
        %359 = vmatpush.bf16.msra.mxu0 0
        %360 = vmatpush.bf16.msra.mxu0 0
        %361 = vmatpush.bf16.msra.mxu0 0
        %362 = vmatpush.bf16.msra.mxu0 0
        %363 = vmatpush.bf16.msra.mxu0 0
        %364 = vmatpush.bf16.msra.mxu0 0
        %365 = vmatpush.bf16.msra.mxu0 %v352
        %366 = vmatpush.bf16.msra.mxu0 %v351
        %367 = vmatmul.bf16.gmra.mxu0 %v357
        %v368 = vpop.f32.mrf.mxu0
        %v369 = vadd.f32 %v341, %v368
        %v370 = vpop.f32.mrf.mxu0
        %371 = vdwg.mxu0
        %v372 = vtanh.pop %v369
        %v373 = vpack.c.bf16 %v372, %v372
        %v374 = vld [vmem:[%s4] sm:$0xf]
        %v375 = vld [vmem:[%s4 + $0x4] sm:$0xf]
        %v376 = vld [vmem:[%s4 + $0x8] sm:$0xf]
        %v377 = vld [vmem:[%s4 + $0xc] sm:$0xf]
        %v378 = vld [vmem:[%s4 + $0x10] sm:$0xf]
        %v379 = vld [vmem:[%s4 + $0x14] sm:$0xf]
        %v380 = vld [vmem:[%s4 + $0x18] sm:$0xf]
        %v381 = vld [vmem:[%s4 + $0x1c] sm:$0xf]
        %v382 = vld [vmem:[%s4 + $0x20] sm:$0xf]
        %v383 = vld [vmem:[%s4 + $0x24] sm:$0xf]
        %v384 = vld [vmem:[%s4 + $0x28] sm:$0xf]
        %v385 = vld [vmem:[%s4 + $0x2c] sm:$0xf]
        %v386 = vld [vmem:[%s4 + $0x30] sm:$0xf]
        %v387 = vld [vmem:[%s4 + $0x34] sm:$0xf]
        %v388 = vld [vmem:[%s4 + $0x38] sm:$0xf]
        %v389 = vld [vmem:[%s4 + $0x3c] sm:$0xf]
        %v390 = vld [vmem:[#allocation2] sm:$0x1]
        %v392 = vperm.slane %v390, 0
        %v410 = vunpack.c.l.b16 %v374
        %v411 = vunpack.c.l.b16 %v375
        %v412 = vunpack.c.l.b16 %v376
        %v413 = vunpack.c.l.b16 %v377
        %v414 = vunpack.c.l.b16 %v378
        %v415 = vunpack.c.l.b16 %v379
        %v416 = vunpack.c.l.b16 %v380
        %v417 = vunpack.c.l.b16 %v381
        %v418 = vunpack.c.l.b16 %v382
        %v419 = vunpack.c.l.b16 %v383
        %v420 = vunpack.c.l.b16 %v384
        %v421 = vunpack.c.l.b16 %v385
        %v422 = vunpack.c.l.b16 %v386
        %v423 = vunpack.c.l.b16 %v387
        %v424 = vunpack.c.l.b16 %v388
        %v425 = vunpack.c.l.b16 %v389
        %v426 = vpack.c.b16 %v411, %v410
        %v427 = vpack.c.b16 %v413, %v412
        %v428 = vpack.c.b16 %v415, %v414
        %v429 = vpack.c.b16 %v417, %v416
        %v430 = vpack.c.b16 %v419, %v418
        %v431 = vpack.c.b16 %v421, %v420
        %v432 = vpack.c.b16 %v423, %v422
        %v433 = vpack.c.b16 %v425, %v424
        %442 = vmatpush.bf16.msra.mxu0 %v433
        %443 = vmatpush.bf16.msra.mxu0 %v432
        %444 = vmatpush.bf16.msra.mxu0 %v431
        %445 = vmatpush.bf16.msra.mxu0 %v430
        %446 = vmatpush.bf16.msra.mxu0 %v429
        %447 = vmatpush.bf16.msra.mxu0 %v428
        %448 = vmatpush.bf16.msra.mxu0 %v427
        %449 = vmatpush.bf16.msra.mxu0 %v426
        %450 = vmatmul.bf16.gmra.mxu0 %v373
        %v451 = vpop.f32.mrf.mxu0
        %v452 = vadd.f32 %v392, %v451
        %v453 = vpop.f32.mrf.mxu0
        %454 = vdwg.mxu0
        %v455 = vtanh.pop %v452
        %v456 = vpack.c.bf16 %v455, %v455
        %v457 = vld [vmem:[%s6] sm:$0xf]
        %v458 = vld [vmem:[%s6 + $0x4] sm:$0xf]
        %v459 = vld [vmem:[%s6 + $0x8] sm:$0xf]
        %v460 = vld [vmem:[%s6 + $0xc] sm:$0xf]
        %v461 = vld [vmem:[%s6 + $0x10] sm:$0xf]
        %v462 = vld [vmem:[%s6 + $0x14] sm:$0xf]
        %v463 = vld [vmem:[%s6 + $0x18] sm:$0xf]
        %v464 = vld [vmem:[%s6 + $0x1c] sm:$0xf]
        %v465 = vld [vmem:[%s6 + $0x20] sm:$0xf]
        %v466 = vld [vmem:[%s6 + $0x24] sm:$0xf]
        %v467 = vld [vmem:[%s6 + $0x28] sm:$0xf]
        %v468 = vld [vmem:[%s6 + $0x2c] sm:$0xf]
        %v469 = vld [vmem:[%s6 + $0x30] sm:$0xf]
        %v470 = vld [vmem:[%s6 + $0x34] sm:$0xf]
        %v471 = vld [vmem:[%s6 + $0x38] sm:$0xf]
        %v472 = vld [vmem:[%s6 + $0x3c] sm:$0xf]
        %v473 = vld [vmem:[%s7] sm:$0x1]
        %v475 = vperm.slane %v473, 0
        %v493 = vunpack.c.l.b16 %v457
        %v494 = vunpack.c.l.b16 %v458
        %v495 = vunpack.c.l.b16 %v459
        %v496 = vunpack.c.l.b16 %v460
        %v497 = vunpack.c.l.b16 %v461
        %v498 = vunpack.c.l.b16 %v462
        %v499 = vunpack.c.l.b16 %v463
        %v500 = vunpack.c.l.b16 %v464
        %v501 = vunpack.c.l.b16 %v465
        %v502 = vunpack.c.l.b16 %v466
        %v503 = vunpack.c.l.b16 %v467
        %v504 = vunpack.c.l.b16 %v468
        %v505 = vunpack.c.l.b16 %v469
        %v506 = vunpack.c.l.b16 %v470
        %v507 = vunpack.c.l.b16 %v471
        %v508 = vunpack.c.l.b16 %v472
        %v509 = vpack.c.b16 %v494, %v493
        %v510 = vpack.c.b16 %v496, %v495
        %v511 = vpack.c.b16 %v498, %v497
        %v512 = vpack.c.b16 %v500, %v499
        %v513 = vpack.c.b16 %v502, %v501
        %v514 = vpack.c.b16 %v504, %v503
        %v515 = vpack.c.b16 %v506, %v505
        %v516 = vpack.c.b16 %v508, %v507
        %525 = vmatpush.bf16.msra.mxu0 %v516
        %526 = vmatpush.bf16.msra.mxu0 %v515
        %527 = vmatpush.bf16.msra.mxu0 %v514
        %528 = vmatpush.bf16.msra.mxu0 %v513
        %529 = vmatpush.bf16.msra.mxu0 %v512
        %530 = vmatpush.bf16.msra.mxu0 %v511
        %531 = vmatpush.bf16.msra.mxu0 %v510
        %532 = vmatpush.bf16.msra.mxu0 %v509
        %533 = vmatmul.bf16.gmra.mxu0 %v456
        %v534 = vpop.f32.mrf.mxu0
        %v535 = vadd.f32 %v475, %v534
        %v536 = vpop.f32.mrf.mxu0
        %537 = vdwg.mxu0
        %vm538 = vcmask 64512
        %v539 = vsel %vm538, %v535, -inf
        %540 = vmax.xlane.f32.xlu0 %v539
        %v541 = vpop.xlane.xlu0 %540
        %v542 = vsub.f32 %v535, %v541
        %v543 = vmul.f32 %v542, 1.442695
        %v544 = vpow.pop %v543
        %v545 = vsel %vm538, %v544, 0.0
        %546 = vadd.xlane.f32.xlu0 %v545
        %v547 = vpop.xlane.xlu0 %546
        %v548 = vlog2.pop %v547
        %v549 = vmul.f32 %v548, 0.6931472
        %v550 = vsub.f32 %v542, %v549
        %v551 = vmul.f32 %v550, 1.442695
        %v552 = vpow.pop %v551
        %v553 = vld [vmem:[%s328] sm:$0xff]
        %v554 = vlaneseq
        %v555 = vand.u32 %v554, 127
        %556 = vset.pattern.permute.xlu0 0
        %557 = vperm.xlu0 %556, %v553
        %v558 = vpop.permute.xlu0 %557
        %vm559 = vcmp.eq.s32.totalorder %v555, %v558
        %v560 = vsel %vm559, 1, 0
        %v561 = vcvt.s32.f32 %v560
        %v562 = vmul.f32 %v550, %v561
        %v563 = vsel %vm538, %v562, 0.0
        %564 = vadd.xlane.f32.xlu0 %v563
        %v565 = vpop.xlane.xlu0 %564
        %v566 = vmul.f32 %v552, %v550
        %v567 = vsel %vm538, %v566, 0.0
        %568 = vadd.xlane.f32.xlu0 %v567
        %v569 = vpop.xlane.xlu0 %568
        %v570 = vsub.f32 0.0, %v569
        %vm571 = vcmp.eq.s32.totalorder %v555, 0
        %vm572 = vcmp.eq.s32.totalorder %v555, 1
        %vm573 = vcmp.eq.s32.totalorder %v555, 2
        %v574 = vsel %vm573, %v570, 0.0
        %576 = vset.pattern.permute.xlu0 8
        %577 = vperm.xlu0 %576, %v535
        %v578 = vpop.permute.xlu0 %577
        %v580 = vsel %vm572, %v578, %v574
        %v581 = vsel %vm571, %v565, %v580
        %582 = vst.msk [vmem:[%s332] sm:$0xff] %vm538, %v581
        %p583 = scmp.lt.s32.totalorder %s20, 2
        %s584 = scalar_select %p583, %s20, 2
        %s585 = smul.addr %s584, 8
        %s586 = scalar_lea.vmem %s8, %s585
        // Predicated region
        $region57: #{tpu_custom_call.1} parent=51 // pred_check
          %p587 = pneg %p216
        $region58: #{tpu_custom_call.1} parent=51 // pred_check_branch
          %589 = sbr.rel (%p587) target = $region60
        $region59: #{tpu_custom_call.1} parent=51 // pred_region
          _
        $region60: #{tpu_custom_call.1} parent=51 // pred_fallthru
          _
      $region52: #{tpu_custom_call.1} parent=5 // pred_fallthru
        _
      %p590 = scmp.le.s32.totalorder 2, %s15
      // Predicated region
      $region61: #{tpu_custom_call.1} parent=5 // pred_check
        %p591 = pneg %p590
      $region62: #{tpu_custom_call.1} parent=5 // pred_check_branch
        %593 = sbr.rel (%p591) target = $region64
      $region63: #{tpu_custom_call.1} parent=5 // pred_region
        %s594 = ssub.s32 %s15, 2
        // Predicated region
        $region65: #{tpu_custom_call.1} parent=63 // pred_check
          %p595 = pneg %p222
        $region66: #{tpu_custom_call.1} parent=63 // pred_check_branch
          %597 = sbr.rel (%p595) target = $region68
        $region67: #{tpu_custom_call.1} parent=63 // pred_region
          %p598 = scmp.lt.s32.totalorder %s21, 2
          %s599 = scalar_select %p598, %s21, 2
          %s600 = smul.addr %s599, 8
          %s601 = scalar_lea.vmem %s8, %s600
        $region68: #{tpu_custom_call.1} parent=63 // pred_fallthru
          _
      $region64: #{tpu_custom_call.1} parent=5 // pred_fallthru
        _
    $region6: #{tpu_custom_call.1} parent=1 // loop_footer
      %s19 = sadd.s32 1, %s15
    $region7: #{tpu_custom_call.1} parent=1 // loop_footer_branch
      %14 = sbr.rel target = $region3
    $region8: #{tpu_custom_call.1} parent=1 // loop_exit
      _
    %602 = vsyncpa [#allocation3], 1
    %s603 = scalar_lea.sflag [#allocation3], 1
    %604 = vsyncpa %s603, 1

</llo_original>
